<compile_context>
chip_gen: v7x
topology: tpu7x:2x2x1
jax: 0.10.0
libtpu: 0.0.40
codegen_flags: <defaults>
</compile_context>

<pallas_src>
import functools

import jax
import jax.numpy as jnp
from jax.experimental import pallas as pl
from jax.experimental.pallas import tpu as pltpu


def _layernorm_kernel(x_ref, w_ref, b_ref, o_ref, *, eps, hidden, groups):
    """Normalizes `groups` logical rows packed along the lane axis.

    x_ref/o_ref blocks: (row_tile, groups*hidden).  w_ref/b_ref: (1, hidden)
    float32, VMEM-resident (constant index_map).  groups == 1 is the ordinary
    un-packed case (hidden == full block width).
    """
    w = w_ref[...]                      # already float32 (upcast once in wrapper)
    b = b_ref[...]
    for g in range(groups):             # static Python unroll (groups <= 16)
        sl = pl.ds(g * hidden, hidden)  # static lane slice
        x = x_ref[:, sl].astype(jnp.float32)            # (row_tile, hidden) f32
        u = jnp.mean(x, axis=-1, keepdims=True)         # mean over hidden
        xc = x - u
        s = jnp.mean(xc * xc, axis=-1, keepdims=True)   # biased variance (two-pass)
        y = xc * jax.lax.rsqrt(s + eps)                 # eps inside sqrt (TF style)
        o_ref[:, sl] = (w * y + b).astype(o_ref.dtype)


def _round_down_to(v, m):
    return max(m, (v // m) * m)


def _vmem_budgets():
    """(streaming budget, scoped-vmem limit cap) in bytes, per TPU generation."""
    try:
        cap = pltpu.get_tpu_info().vmem_capacity_bytes
    except Exception:
        cap = 64 * 1024 * 1024                      # unknown -> assume v7x-sized VMEM
    if cap >= 96 * 1024 * 1024:                     # v5e / v6e: 128 MiB physical
        return 64 * 1024 * 1024, 96 * 1024 * 1024
    return 24 * 1024 * 1024, 48 * 1024 * 1024       # v7x: 64 MiB physical


def _per_row_vmem_bytes(width, in_bytes, out_bytes):
    # 2x double-buffered input + 2x double-buffered output + f32 temporaries
    # (xc, y; plus the upcast copy of x for sub-f32 inputs).
    temp_bytes = 8 if in_bytes >= 4 else 12
    return 2 * width * in_bytes + 2 * width * out_bytes + width * temp_bytes


def _choose_row_tile(rows, per_row, in_bytes, budget):
    # Sublane pack for the input dtype: f32 -> 8, bf16 -> 16, int8/fp8 -> 32.
    pack = 8 * (4 // max(1, in_bytes))
    tile = min(int(budget // max(1, per_row)), 4096)
    tile = _round_down_to(tile, pack)
    # Target >= 4 grid steps (>= 2 per v7x TensorCore) so double-buffering can
    # overlap DMA with compute and megacore work is balanced; prefer an even
    # step count so neither core gets an extra step.
    if rows >= 4 * pack:
        tile = min(tile, _round_down_to(pl.cdiv(rows, 4), pack))
        steps = pl.cdiv(rows, tile)
        if steps % 2 == 1:
            t2 = _round_down_to(pl.cdiv(rows, steps + 1), pack)
            if pl.cdiv(rows, t2) % 2 == 0:
                tile = t2
    if tile >= rows:
        tile = rows                      # full-extent block is always a legal shape
    return max(1, tile)


def layer_norm(x, weight, bias, eps=1e-12, row_tile=None):
    """x: (..., H) array. weight, bias: (H,). Returns same shape/dtype as x."""
    orig_shape = x.shape
    H = orig_shape[-1]
    x2 = x.reshape(-1, H)
    R = x2.shape[0]
    if R == 0:
        return x

    in_bytes = x2.dtype.itemsize
    out_bytes = in_bytes
    budget, limit_cap = _vmem_budgets()

    # Lane-pack small hidden sizes: each 128-lane row carries groups = 128//H
    # logical rows (pure reshape in HBM, no copy).  Falls back to the un-packed
    # path when H doesn't divide 128 or R isn't a multiple of `groups` (keeps
    # the no-wrapper-pad property; tail case only).
    groups = 1
    if H < 128 and 128 % H == 0 and H >= 8 and R % (128 // H) == 0:
        groups = 128 // H
    width = groups * H
    rows = R // groups
    x2 = x2.reshape(rows, width)

    # Upcast params to f32 once here (not per grid step inside the kernel).
    w2 = weight.astype(jnp.float32).reshape(1, H)
    b2 = bias.astype(jnp.float32).reshape(1, H)

    per_row = _per_row_vmem_bytes(width, in_bytes, out_bytes)
    if row_tile is None:
        row_tile = _choose_row_tile(rows, per_row, in_bytes, budget)
    row_tile = min(row_tile, rows)

    # Ragged grid -- no wrapper-side pad/slice (would double HBM traffic for a
    # bandwidth-bound op).  Tail rows past `rows` compute on garbage but their
    # stores are dropped; per-row math means no cross-row contamination.
    grid = (pl.cdiv(rows, row_tile),)

    # Scoped-VMEM limit sized from the actual working set (+ headroom), clamped
    # per generation (96 MiB on 128-MiB parts, 48 MiB on v7x's 64 MiB).
    working = row_tile * per_row + 2 * 2 * H * 4        # + double-buffered w, b
    vmem_limit = int(min(max(working + 4 * 1024 * 1024, 8 * 1024 * 1024), limit_cap))

    out = pl.pallas_call(
        functools.partial(_layernorm_kernel, eps=eps, hidden=H, groups=groups),
        out_shape=jax.ShapeDtypeStruct((rows, width), x.dtype),
        grid_spec=pltpu.PrefetchScalarGridSpec(
            num_scalar_prefetch=0,
            grid=grid,
            in_specs=[
                pl.BlockSpec((row_tile, width), lambda i: (i, 0)),
                # weight / bias: constant index_map -> DMA'd once, stay resident.
                pl.BlockSpec((1, H), lambda i: (0, 0)),
                pl.BlockSpec((1, H), lambda i: (0, 0)),
            ],
            out_specs=pl.BlockSpec((row_tile, width), lambda i: (i, 0)),
        ),
        compiler_params=pltpu.CompilerParams(
            dimension_semantics=("parallel",),
            vmem_limit_bytes=vmem_limit,
        ),
    )(x2, w2, b2)

    return out.reshape(orig_shape)


if __name__ == "__main__":
    key = jax.random.PRNGKey(0)
    batch, seq, hidden = 2, 8, 32

    x = jax.random.normal(key, (batch, seq, hidden), dtype=jnp.float32)

    # Deterministic params, matching nn.Parameter(torch.ones/zeros(hidden)).
    weight = jnp.ones((hidden,), dtype=jnp.float32)
    bias = jnp.zeros((hidden,), dtype=jnp.float32)

    y = layer_norm(x, weight, bias, eps=1e-12)
    y = jax.block_until_ready(y)

    # Reference check in plain JAX (mirrors the PyTorch forward exactly).
    u = jnp.mean(x, axis=-1, keepdims=True)
    s = jnp.mean((x - u) ** 2, axis=-1, keepdims=True)
    ref = weight * ((x - u) / jnp.sqrt(s + 1e-12)) + bias
    assert jnp.allclose(y, ref, atol=1e-5, rtol=1e-5), "mismatch vs reference"

    print("KERNEL_OK")
</pallas_src>

<mosaic_0001>
module attributes {stable_mosaic.version = 11 : i64} {
  func.func @_layernorm_kernel(%arg0: i32, %arg1: memref<4x128xf32, #tpu.memory_space<vmem>>, %arg2: memref<1x32xf32, #tpu.memory_space<vmem>>, %arg3: memref<1x32xf32, #tpu.memory_space<vmem>>, %arg4: memref<4x128xf32, #tpu.memory_space<vmem>>) attributes {dimension_semantics = [#tpu.dimension_semantics<parallel>], iteration_bounds = array<i64: 1>, scalar_prefetch = 0 : i64, scratch_operands = 0 : i64, tpu.core_type = #tpu.core_type<tc>, window_params = [{transform_indices = @transform_0, window_bounds = array<i64: 4, 128>}, {pipeline_mode = #tpu.pipeline_mode<synchronous>, transform_indices = @transform_1, window_bounds = array<i64: 1, 32>}, {pipeline_mode = #tpu.pipeline_mode<synchronous>, transform_indices = @transform_2, window_bounds = array<i64: 1, 32>}, {transform_indices = @transform_3, window_bounds = array<i64: 4, 128>}]} {
    %c0 = arith.constant 0 : index
    %c0_0 = arith.constant 0 : index
    %0 = vector.load %arg2[%c0, %c0_0] : memref<1x32xf32, #tpu.memory_space<vmem>>, vector<1x32xf32>
    %c0_1 = arith.constant 0 : index
    %c0_2 = arith.constant 0 : index
    %1 = vector.load %arg3[%c0_1, %c0_2] : memref<1x32xf32, #tpu.memory_space<vmem>>, vector<1x32xf32>
    %c0_3 = arith.constant 0 : index
    %c0_4 = arith.constant 0 : index
    %2 = vector.load %arg1[%c0_3, %c0_4] : memref<4x128xf32, #tpu.memory_space<vmem>>, vector<4x32xf32>
    %cst = arith.constant dense<0.000000e+00> : vector<4xf32>
    %3 = vector.multi_reduction <add>, %2, %cst [1] : vector<4x32xf32> to vector<4xf32>
    %4 = vector.shape_cast %3 : vector<4xf32> to vector<4x1xf32>
    %cst_5 = arith.constant 3.200000e+01 : f32
    %5 = vector.broadcast %cst_5 : f32 to vector<4x1xf32>
    %6 = arith.divf %4, %5 : vector<4x1xf32>
    %7 = vector.broadcast %6 : vector<4x1xf32> to vector<4x32xf32>
    %8 = arith.subf %2, %7 : vector<4x32xf32>
    %9 = arith.mulf %8, %8 : vector<4x32xf32>
    %cst_6 = arith.constant dense<0.000000e+00> : vector<4xf32>
    %10 = vector.multi_reduction <add>, %9, %cst_6 [1] : vector<4x32xf32> to vector<4xf32>
    %11 = vector.shape_cast %10 : vector<4xf32> to vector<4x1xf32>
    %cst_7 = arith.constant 3.200000e+01 : f32
    %12 = vector.broadcast %cst_7 : f32 to vector<4x1xf32>
    %13 = arith.divf %11, %12 : vector<4x1xf32>
    %cst_8 = arith.constant 9.99999996E-13 : f32
    %14 = vector.broadcast %cst_8 : f32 to vector<4x1xf32>
    %15 = arith.addf %13, %14 : vector<4x1xf32>
    %16 = math.rsqrt %15 : vector<4x1xf32>
    %17 = vector.broadcast %16 : vector<4x1xf32> to vector<4x32xf32>
    %18 = arith.mulf %8, %17 : vector<4x32xf32>
    %19 = vector.broadcast %0 : vector<1x32xf32> to vector<4x32xf32>
    %20 = arith.mulf %19, %18 : vector<4x32xf32>
    %21 = vector.broadcast %1 : vector<1x32xf32> to vector<4x32xf32>
    %22 = arith.addf %20, %21 : vector<4x32xf32>
    %c0_9 = arith.constant 0 : index
    %c0_10 = arith.constant 0 : index
    %23 = vector.load %arg4[%c0_9, %c0_10] : memref<4x128xf32, #tpu.memory_space<vmem>>, vector<4x32xf32>
    tpu.vector_store %arg4[%c0_9, %c0_10], %22 {strides = array<i32>} : memref<4x128xf32, #tpu.memory_space<vmem>>, vector<4x32xf32>,
    %c0_11 = arith.constant 0 : index
    %c32 = arith.constant 32 : index
    %24 = vector.load %arg1[%c0_11, %c32] : memref<4x128xf32, #tpu.memory_space<vmem>>, vector<4x32xf32>
    %cst_12 = arith.constant dense<0.000000e+00> : vector<4xf32>
    %25 = vector.multi_reduction <add>, %24, %cst_12 [1] : vector<4x32xf32> to vector<4xf32>
    %26 = vector.shape_cast %25 : vector<4xf32> to vector<4x1xf32>
    %cst_13 = arith.constant 3.200000e+01 : f32
    %27 = vector.broadcast %cst_13 : f32 to vector<4x1xf32>
    %28 = arith.divf %26, %27 : vector<4x1xf32>
    %29 = vector.broadcast %28 : vector<4x1xf32> to vector<4x32xf32>
    %30 = arith.subf %24, %29 : vector<4x32xf32>
    %31 = arith.mulf %30, %30 : vector<4x32xf32>
    %cst_14 = arith.constant dense<0.000000e+00> : vector<4xf32>
    %32 = vector.multi_reduction <add>, %31, %cst_14 [1] : vector<4x32xf32> to vector<4xf32>
    %33 = vector.shape_cast %32 : vector<4xf32> to vector<4x1xf32>
    %cst_15 = arith.constant 3.200000e+01 : f32
    %34 = vector.broadcast %cst_15 : f32 to vector<4x1xf32>
    %35 = arith.divf %33, %34 : vector<4x1xf32>
    %cst_16 = arith.constant 9.99999996E-13 : f32
    %36 = vector.broadcast %cst_16 : f32 to vector<4x1xf32>
    %37 = arith.addf %35, %36 : vector<4x1xf32>
    %38 = math.rsqrt %37 : vector<4x1xf32>
    %39 = vector.broadcast %38 : vector<4x1xf32> to vector<4x32xf32>
    %40 = arith.mulf %30, %39 : vector<4x32xf32>
    %41 = vector.broadcast %0 : vector<1x32xf32> to vector<4x32xf32>
    %42 = arith.mulf %41, %40 : vector<4x32xf32>
    %43 = vector.broadcast %1 : vector<1x32xf32> to vector<4x32xf32>
    %44 = arith.addf %42, %43 : vector<4x32xf32>
    %c0_17 = arith.constant 0 : index
    %c32_18 = arith.constant 32 : index
    %45 = vector.load %arg4[%c0_17, %c32_18] : memref<4x128xf32, #tpu.memory_space<vmem>>, vector<4x32xf32>
    tpu.vector_store %arg4[%c0_17, %c32_18], %44 {strides = array<i32>} : memref<4x128xf32, #tpu.memory_space<vmem>>, vector<4x32xf32>,
    %c0_19 = arith.constant 0 : index
    %c64 = arith.constant 64 : index
    %46 = vector.load %arg1[%c0_19, %c64] : memref<4x128xf32, #tpu.memory_space<vmem>>, vector<4x32xf32>
    %cst_20 = arith.constant dense<0.000000e+00> : vector<4xf32>
    %47 = vector.multi_reduction <add>, %46, %cst_20 [1] : vector<4x32xf32> to vector<4xf32>
    %48 = vector.shape_cast %47 : vector<4xf32> to vector<4x1xf32>
    %cst_21 = arith.constant 3.200000e+01 : f32
    %49 = vector.broadcast %cst_21 : f32 to vector<4x1xf32>
    %50 = arith.divf %48, %49 : vector<4x1xf32>
    %51 = vector.broadcast %50 : vector<4x1xf32> to vector<4x32xf32>
    %52 = arith.subf %46, %51 : vector<4x32xf32>
    %53 = arith.mulf %52, %52 : vector<4x32xf32>
    %cst_22 = arith.constant dense<0.000000e+00> : vector<4xf32>
    %54 = vector.multi_reduction <add>, %53, %cst_22 [1] : vector<4x32xf32> to vector<4xf32>
    %55 = vector.shape_cast %54 : vector<4xf32> to vector<4x1xf32>
    %cst_23 = arith.constant 3.200000e+01 : f32
    %56 = vector.broadcast %cst_23 : f32 to vector<4x1xf32>
    %57 = arith.divf %55, %56 : vector<4x1xf32>
    %cst_24 = arith.constant 9.99999996E-13 : f32
    %58 = vector.broadcast %cst_24 : f32 to vector<4x1xf32>
    %59 = arith.addf %57, %58 : vector<4x1xf32>
    %60 = math.rsqrt %59 : vector<4x1xf32>
    %61 = vector.broadcast %60 : vector<4x1xf32> to vector<4x32xf32>
    %62 = arith.mulf %52, %61 : vector<4x32xf32>
    %63 = vector.broadcast %0 : vector<1x32xf32> to vector<4x32xf32>
    %64 = arith.mulf %63, %62 : vector<4x32xf32>
    %65 = vector.broadcast %1 : vector<1x32xf32> to vector<4x32xf32>
    %66 = arith.addf %64, %65 : vector<4x32xf32>
    %c0_25 = arith.constant 0 : index
    %c64_26 = arith.constant 64 : index
    %67 = vector.load %arg4[%c0_25, %c64_26] : memref<4x128xf32, #tpu.memory_space<vmem>>, vector<4x32xf32>
    tpu.vector_store %arg4[%c0_25, %c64_26], %66 {strides = array<i32>} : memref<4x128xf32, #tpu.memory_space<vmem>>, vector<4x32xf32>,
    %c0_27 = arith.constant 0 : index
    %c96 = arith.constant 96 : index
    %68 = vector.load %arg1[%c0_27, %c96] : memref<4x128xf32, #tpu.memory_space<vmem>>, vector<4x32xf32>
    %cst_28 = arith.constant dense<0.000000e+00> : vector<4xf32>
    %69 = vector.multi_reduction <add>, %68, %cst_28 [1] : vector<4x32xf32> to vector<4xf32>
    %70 = vector.shape_cast %69 : vector<4xf32> to vector<4x1xf32>
    %cst_29 = arith.constant 3.200000e+01 : f32
    %71 = vector.broadcast %cst_29 : f32 to vector<4x1xf32>
    %72 = arith.divf %70, %71 : vector<4x1xf32>
    %73 = vector.broadcast %72 : vector<4x1xf32> to vector<4x32xf32>
    %74 = arith.subf %68, %73 : vector<4x32xf32>
    %75 = arith.mulf %74, %74 : vector<4x32xf32>
    %cst_30 = arith.constant dense<0.000000e+00> : vector<4xf32>
    %76 = vector.multi_reduction <add>, %75, %cst_30 [1] : vector<4x32xf32> to vector<4xf32>
    %77 = vector.shape_cast %76 : vector<4xf32> to vector<4x1xf32>
    %cst_31 = arith.constant 3.200000e+01 : f32
    %78 = vector.broadcast %cst_31 : f32 to vector<4x1xf32>
    %79 = arith.divf %77, %78 : vector<4x1xf32>
    %cst_32 = arith.constant 9.99999996E-13 : f32
    %80 = vector.broadcast %cst_32 : f32 to vector<4x1xf32>
    %81 = arith.addf %79, %80 : vector<4x1xf32>
    %82 = math.rsqrt %81 : vector<4x1xf32>
    %83 = vector.broadcast %82 : vector<4x1xf32> to vector<4x32xf32>
    %84 = arith.mulf %74, %83 : vector<4x32xf32>
    %85 = vector.broadcast %0 : vector<1x32xf32> to vector<4x32xf32>
    %86 = arith.mulf %85, %84 : vector<4x32xf32>
    %87 = vector.broadcast %1 : vector<1x32xf32> to vector<4x32xf32>
    %88 = arith.addf %86, %87 : vector<4x32xf32>
    %c0_33 = arith.constant 0 : index
    %c96_34 = arith.constant 96 : index
    %89 = vector.load %arg4[%c0_33, %c96_34] : memref<4x128xf32, #tpu.memory_space<vmem>>, vector<4x32xf32>
    tpu.vector_store %arg4[%c0_33, %c96_34], %88 {strides = array<i32>} : memref<4x128xf32, #tpu.memory_space<vmem>>, vector<4x32xf32>,
    return
  }
  func.func @transform_0(%arg0: i32) -> (i32, i32) {
    %c0_i32 = arith.constant 0 : i32
    %c0_i32_0 = arith.constant 0 : i32
    return %arg0, %c0_i32 : i32, i32
  }
  func.func @transform_1(%arg0: i32) -> (i32, i32) {
    %c0_i32 = arith.constant 0 : i32
    %c0_i32_0 = arith.constant 0 : i32
    %c0_i32_1 = arith.constant 0 : i32
    return %c0_i32, %c0_i32_0 : i32, i32
  }
  func.func @transform_2(%arg0: i32) -> (i32, i32) {
    %c0_i32 = arith.constant 0 : i32
    %c0_i32_0 = arith.constant 0 : i32
    %c0_i32_1 = arith.constant 0 : i32
    return %c0_i32, %c0_i32_0 : i32, i32
  }
  func.func @transform_3(%arg0: i32) -> (i32, i32) {
    %c0_i32 = arith.constant 0 : i32
    %c0_i32_0 = arith.constant 0 : i32
    return %arg0, %c0_i32 : i32, i32
  }
}

</mosaic_0001>

<llo_original>
// kernel: tpu_custom_call.1
$region0: #{tpu_custom_call.1}
  #allocation0 [shape = 'u32[]', space=smem, size = 0x4, offset = 0x4, fixed_abs, tag = 'smem constant byte address 0x4 - core index']
  #allocation1 [shape = 'u32[144,128]{1,0:T(1,128)}', space=vmem, size = 0x12000, scoped, tag = 'internal scratch']
  %s0 = inlined_call_operand.hbm [shape: f32[4,128], index: 0, kind: input, shape index: {}]
  %s1 = inlined_call_operand.vmem [shape: f32[1,32], index: 1, kind: input, shape index: {}]
  %s2 = inlined_call_operand.vmem [shape: f32[1,32], index: 2, kind: input, shape index: {}]
  %s3 = inlined_call_operand.hbm [shape: f32[4,128], index: 3, kind: output, shape index: {}]
  %s4 = sld [smem:[#allocation0]]
  $region26: #{tpu_custom_call.1} parent=0
    _
  %s6 = ssub.s32 1, %s4
  %s7 = scalar_select 0, %s6, %s4
  $region1: #{tpu_custom_call.1} parent=0
    #allocation2 [shape = 'u8[2048]{0}', space=vmem, size = 0x800, scoped, tag = 'input window, operand 0, single buffered']
    #allocation3 [shape = 's32[1]{0}', space=sflag, size = 0x4, scoped, tag = 'scoped memory for tpu_custom_call.1']
    #allocation4 [shape = 's32[1]{0}', space=sflag, size = 0x4, scoped, tag = 'scoped memory for tpu_custom_call.1']
    #allocation5 [shape = 'u8[2048]{0}', space=vmem, size = 0x800, scoped, tag = 'output window, operand 0, single buffered']
    %8 = vsyncpa [#allocation3], 0
    %9 = vsyncpa [#allocation4], 0
    // Predicated region
    $region2: #{tpu_custom_call.1} parent=1 // pred_check
      _
    $region3: #{tpu_custom_call.1} parent=1 // pred_check_branch
      %11 = sbr.rel (0) target = $region5
    $region4: #{tpu_custom_call.1} parent=1 // pred_region
      %s13 = ssub.s32 64, 64
      %14 = vsyncadd [#allocation3], %s13
      %s16 = sshll.u32 [#allocation2], 4
      %s17 = int_to_ptr.vmem [resolvable:$true] %s16
      %19 = dma.hbm_to_vmem [thread:$0]  %s0, 64, %s17, [#allocation3]
    $region5: #{tpu_custom_call.1} parent=1 // pred_fallthru
      _
    // Predicated region
    $region6: #{tpu_custom_call.1} parent=1 // pred_check
      _
    $region7: #{tpu_custom_call.1} parent=1 // pred_check_branch
      %21 = sbr.rel (0) target = $region9
    $region8: #{tpu_custom_call.1} parent=1 // pred_region
      _
    $region9: #{tpu_custom_call.1} parent=1 // pred_fallthru
      _
    // Predicated region
    $region10: #{tpu_custom_call.1} parent=1 // pred_check
      _
    $region11: #{tpu_custom_call.1} parent=1 // pred_check_branch
      %23 = sbr.rel (0) target = $region13
    $region12: #{tpu_custom_call.1} parent=1 // pred_region
      _
    $region13: #{tpu_custom_call.1} parent=1 // pred_fallthru
      _
    // Predicated region
    $region14: #{tpu_custom_call.1} parent=1 // pred_check
      _
    $region15: #{tpu_custom_call.1} parent=1 // pred_check_branch
      %25 = sbr.rel (0) target = $region17
    $region16: #{tpu_custom_call.1} parent=1 // pred_region
      %26 = dma.done [#allocation3], 64
    $region17: #{tpu_custom_call.1} parent=1 // pred_fallthru
      _
    %v27 = vld [vmem:[%s1] sm:$0x1]
    %v28 = vld [vmem:[%s2] sm:$0x1]
    %v29 = vld [vmem:[#allocation2] sm:$0xf]
    %vm30 = vcmask 257024
    %v31 = vsel %vm30, %v29, 0.0
    %32 = vadd.xlane.f32.xlu0 %v31
    %v33 = vpop.xlane.xlu0 %32
    %v34 = vrcp.pop 32.0
    %v35 = vmul.f32 %v33, %v34
    %v36 = vsub.f32 %v29, %v35
    %v37 = vmul.f32 %v36, %v36
    %v38 = vsel %vm30, %v37, 0.0
    %39 = vadd.xlane.f32.xlu0 %v38
    %v40 = vpop.xlane.xlu0 %39
    %v41 = vmul.f32 %v40, %v34
    %v42 = vadd.f32 %v41, 1e-12
    %v43 = vrsqrt.pop %v42
    %v44 = vmul.f32 %v36, %v43
    %v46 = vlaneseq
    %v47 = vshrl.u32 %v46, 7
    %v48 = vsub.s32 0, %v47
    %v49 = vrot.slane %v27, %v48
    %v51 = vmul.f32 %v49, %v44
    %v53 = vlaneseq
    %v54 = vshrl.u32 %v53, 7
    %v55 = vsub.s32 0, %v54
    %v56 = vrot.slane %v28, %v55
    %v58 = vadd.f32 %v51, %v56
    %59 = vst.msk [vmem:[#allocation5] sm:$0xf] %vm30, %v58
    %v60 = vld [vmem:[#allocation2] sm:$0xf]
    %62 = vrot.lane.b32.xlu0 %v60, 96
    %v63 = vpop.permute.xlu0 %62
    %v65 = vsel %vm30, %v63, 0.0
    %66 = vadd.xlane.f32.xlu0 %v65
    %v67 = vpop.xlane.xlu0 %66
    %v68 = vmul.f32 %v67, %v34
    %v69 = vsub.f32 %v60, %v68
    %v70 = vmul.f32 %v69, %v69
    %72 = vrot.lane.b32.xlu0 %v70, 96
    %v73 = vpop.permute.xlu0 %72
    %v75 = vsel %vm30, %v73, 0.0
    %76 = vadd.xlane.f32.xlu0 %v75
    %v77 = vpop.xlane.xlu0 %76
    %v78 = vmul.f32 %v77, %v34
    %v79 = vadd.f32 %v78, 1e-12
    %v80 = vrsqrt.pop %v79
    %v81 = vmul.f32 %v69, %v80
    %83 = vrot.lane.b32.xlu0 %v81, 96
    %v84 = vpop.permute.xlu0 %83
    %v86 = vmul.f32 %v49, %v84
    %v87 = vadd.f32 %v86, %v56
    %89 = vrot.lane.b32.xlu0 %v87, 32
    %v90 = vpop.permute.xlu0 %89
    %vm92 = vcmask 519424
    %93 = vst.msk [vmem:[#allocation5] sm:$0xf] %vm92, %v90
    %v94 = vld [vmem:[#allocation2] sm:$0xf]
    %96 = vrot.lane.b32.xlu0 %v94, 64
    %v97 = vpop.permute.xlu0 %96
    %v99 = vsel %vm30, %v97, 0.0
    %100 = vadd.xlane.f32.xlu0 %v99
    %v101 = vpop.xlane.xlu0 %100
    %v102 = vmul.f32 %v101, %v34
    %v103 = vsub.f32 %v94, %v102
    %v104 = vmul.f32 %v103, %v103
    %106 = vrot.lane.b32.xlu0 %v104, 64
    %v107 = vpop.permute.xlu0 %106
    %v109 = vsel %vm30, %v107, 0.0
    %110 = vadd.xlane.f32.xlu0 %v109
    %v111 = vpop.xlane.xlu0 %110
    %v112 = vmul.f32 %v111, %v34
    %v113 = vadd.f32 %v112, 1e-12
    %v114 = vrsqrt.pop %v113
    %v115 = vmul.f32 %v103, %v114
    %117 = vrot.lane.b32.xlu0 %v115, 64
    %v118 = vpop.permute.xlu0 %117
    %v120 = vmul.f32 %v49, %v118
    %v121 = vadd.f32 %v120, %v56
    %123 = vrot.lane.b32.xlu0 %v121, 64
    %v124 = vpop.permute.xlu0 %123
    %vm126 = vcmask 781824
    %127 = vst.msk [vmem:[#allocation5] sm:$0xf] %vm126, %v124
    %v128 = vld [vmem:[#allocation2] sm:$0xf]
    %130 = vrot.lane.b32.xlu0 %v128, 32
    %v131 = vpop.permute.xlu0 %130
    %v133 = vsel %vm30, %v131, 0.0
    %134 = vadd.xlane.f32.xlu0 %v133
    %v135 = vpop.xlane.xlu0 %134
    %v136 = vmul.f32 %v135, %v34
    %v137 = vsub.f32 %v128, %v136
    %v138 = vmul.f32 %v137, %v137
    %140 = vrot.lane.b32.xlu0 %v138, 32
    %v141 = vpop.permute.xlu0 %140
    %v143 = vsel %vm30, %v141, 0.0
    %144 = vadd.xlane.f32.xlu0 %v143
    %v145 = vpop.xlane.xlu0 %144
    %v146 = vmul.f32 %v145, %v34
    %v147 = vadd.f32 %v146, 1e-12
    %v148 = vrsqrt.pop %v147
    %v149 = vmul.f32 %v137, %v148
    %151 = vrot.lane.b32.xlu0 %v149, 32
    %v152 = vpop.permute.xlu0 %151
    %v154 = vmul.f32 %v49, %v152
    %v155 = vadd.f32 %v154, %v56
    %157 = vrot.lane.b32.xlu0 %v155, 96
    %v158 = vpop.permute.xlu0 %157
    %vm160 = vcmask 1044224
    %161 = vst.msk [vmem:[#allocation5] sm:$0xf] %vm160, %v158
    // Predicated region
    $region18: #{tpu_custom_call.1} parent=1 // pred_check
      _
    $region19: #{tpu_custom_call.1} parent=1 // pred_check_branch
      %163 = sbr.rel (0) target = $region21
    $region20: #{tpu_custom_call.1} parent=1 // pred_region
      %s165 = ssub.s32 64, 64
      %166 = vsyncadd [#allocation4], %s165
      %s168 = sshll.u32 [#allocation5], 4
      %s169 = int_to_ptr.vmem [resolvable:$true] %s168
      %171 = dma.vmem_to_hbm [thread:$0]  %s169, 64, %s3, [#allocation4]
    $region21: #{tpu_custom_call.1} parent=1 // pred_fallthru
      _
    // Predicated region
    $region22: #{tpu_custom_call.1} parent=1 // pred_check
      _
    $region23: #{tpu_custom_call.1} parent=1 // pred_check_branch
      %173 = sbr.rel (0) target = $region25
    $region24: #{tpu_custom_call.1} parent=1 // pred_region
      %174 = dma.done [#allocation4], 64
    $region25: #{tpu_custom_call.1} parent=1 // pred_fallthru
      _
    %175 = vsyncpa [#allocation3], 1
    %176 = vsyncpa [#allocation4], 1

</llo_original>
